<compile_context>
chip_gen: v6e
topology: v6e:2x2x1
jax: 0.10.0
libtpu: 0.0.40
codegen_flags: <defaults>
</compile_context>

<pallas_src>
import functools

import jax
import jax.numpy as jnp
from jax.experimental import pallas as pl
from jax.experimental.pallas import tpu as pltpu


def _round_up(x, m):
    return (x + m - 1) // m * m


def _vmem_budget_bytes():
    """Generation-aware VMEM sizing (v7x: 64 MiB physical; v5e/v6e: 128 MiB)."""
    try:
        cap = pltpu.get_tpu_info().vmem_capacity_bytes
    except Exception:
        cap = 64 * 1024 * 1024                    # conservative (v7x-sized) fallback
    budget = cap // 3                             # target working set for kernel buffers
    limit = min(cap // 2, 64 * 1024 * 1024)       # scoped-VMEM limit to request
    return budget, limit


def _scores_tile(x_ref, w1_ref, b1_ref, w2_ref):
    """(tile_n, dim) x tile -> (1, tile_n) f32 scores (lane-dense)."""
    # First Linear on the MXU; accumulate in f32 regardless of the input dtype
    # (x / w1 may be streamed as bf16 by the caller - no wrapper-side cast added).
    h = jnp.dot(x_ref[...], w1_ref[...], preferred_element_type=jnp.float32)
    h = jnp.maximum(h + b1_ref[...].astype(jnp.float32), 0.0)        # (tile_n, hpad)
    # Second Linear (hidden -> 1) as a VPU multiply + lane reduce: a
    # (tile_n, 128)x(128, 1) matmul would use 1/128 of the MXU output lanes.
    # b2 is dropped entirely: softmax is shift-invariant, so it cannot change the output.
    s = jnp.sum(h * w2_ref[...].astype(jnp.float32), axis=-1, keepdims=True)
    return s.reshape(1, -1)                        # one sublane->lane relayout per tile


def _fused_kernel(x_ref, w1_ref, b1_ref, w2_ref, o_ref, *, n_valid, tile_n):
    i = pl.program_id(0)
    # Write this tile's scores into row i of the resident (num_tiles, tile_n) block.
    o_ref[pl.ds(i, 1), :] = _scores_tile(x_ref, w1_ref, b1_ref, w2_ref).astype(o_ref.dtype)

    # Epilogue on the last tile: masked softmax over the whole resident score block.
    @pl.when(i == pl.num_programs(0) - 1)
    def _():
        s = o_ref[...].astype(jnp.float32)                            # (num_tiles, tile_n)
        row = jax.lax.broadcasted_iota(jnp.int32, s.shape, 0)
        lane = jax.lax.broadcasted_iota(jnp.int32, s.shape, 1)
        flat = row * tile_n + lane
        s = jnp.where(flat < n_valid, s, -jnp.inf)                    # pad lanes (incl. garbage)
        m = jnp.max(jnp.max(s, axis=1, keepdims=True), axis=0, keepdims=True)
        e = jnp.exp(s - m)
        d = jnp.sum(jnp.sum(e, axis=1, keepdims=True), axis=0, keepdims=True)
        o_ref[...] = (e * pl.reciprocal(d)).astype(o_ref.dtype)


def _scores_kernel(x_ref, w1_ref, b1_ref, w2_ref, o_ref):
    o_ref[...] = _scores_tile(x_ref, w1_ref, b1_ref, w2_ref).astype(o_ref.dtype)


def _softmax_kernel(s_ref, o_ref, *, n_valid):
    s = s_ref[...].astype(jnp.float32)                                # (1, n_lanes)
    lane = jax.lax.broadcasted_iota(jnp.int32, s.shape, 1)
    s = jnp.where(lane < n_valid, s, -jnp.inf)
    m = jnp.max(s, axis=1, keepdims=True)
    e = jnp.exp(s - m)
    d = jnp.sum(e, axis=1, keepdims=True)
    o_ref[...] = (e * pl.reciprocal(d)).astype(o_ref.dtype)


def attention_forward(x, w1, b1, w2, b2=None, *, tile_n=None, fuse_softmax=None):
    """softmax over the batch of (Linear(dim,hidden) -> ReLU -> Linear(hidden,1))(x).

    x: (N, dim)  w1: (dim, hidden)  b1: (1, hidden)  w2: (hidden, 1)
    b2 is accepted for API compatibility but ignored (softmax shift invariance).
    Returns (1, N) float32 whose single row sums to 1.
    """
    del b2
    n, dim = x.shape
    hidden = w1.shape[1]

    # Zero-pad hidden (e.g. 100) to a lane-dense multiple of 128 (ReLU/dot neutral).
    hpad = _round_up(hidden, 128)
    w2row = w2.T                                                       # (1, hidden)
    if hpad != hidden:
        w1 = jnp.pad(w1, ((0, 0), (0, hpad - hidden)))
        b1 = jnp.pad(b1, ((0, 0), (0, hpad - hidden)))
        w2row = jnp.pad(w2row, ((0, 0), (0, hpad - hidden)))

    budget, vmem_limit = _vmem_budget_bytes()

    # Fuse the softmax epilogue into the score pass when the full score row fits
    # comfortably in VMEM (one launch, no HBM round trip of the scores). For larger
    # N keep the two-pass form: the score pass stays "parallel" (megacore-shardable
    # on v7x) and VMEM only has to hold per-tile buffers.
    if fuse_softmax is None:
        fuse_softmax = _round_up(n, 128) * 4 <= 2 * 1024 * 1024

    if tile_n is None:
        # Per-row VMEM cost: double-buffered x tile + f32 hidden activation.
        per_row = 2 * dim * x.dtype.itemsize + hpad * 4
        fixed = 2 * (dim * hpad + 2 * hpad) * w1.dtype.itemsize        # resident weights (2x buffered)
        if fuse_softmax:
            fixed += 2 * 4 * _round_up(n, 128)                         # resident score block
        avail = max(budget - fixed, 1 * 1024 * 1024)
        cap = max(128, (avail // per_row) // 128 * 128)
        tile_n = min(4096, cap, _round_up(n, 128))

    num_tiles = -(-n // tile_n)           # cdiv; last x block is ragged (no jnp.pad HBM copy)
    n_lanes = num_tiles * tile_n

    x_spec = pl.BlockSpec((tile_n, dim), lambda i: (i, 0))             # streamed x tiles
    w1_spec = pl.BlockSpec((dim, hpad), lambda i: (0, 0))              # VMEM-resident weights
    b1_spec = pl.BlockSpec((1, hpad), lambda i: (0, 0))
    w2_spec = pl.BlockSpec((1, hpad), lambda i: (0, 0))

    if fuse_softmax:
        out2d = pl.pallas_call(
            functools.partial(_fused_kernel, n_valid=n, tile_n=tile_n),
            out_shape=jax.ShapeDtypeStruct((num_tiles, tile_n), jnp.float32),
            grid=(num_tiles,),
            in_specs=[x_spec, w1_spec, b1_spec, w2_spec],
            out_specs=pl.BlockSpec((num_tiles, tile_n), lambda i: (0, 0)),  # resident block
            compiler_params=pltpu.CompilerParams(
                dimension_semantics=("arbitrary",),                    # output block revisited
                vmem_limit_bytes=vmem_limit,
            ),
        )(x, w1, b1, w2row)
        # Row-major (num_tiles, tile_n) -> flat example order; slice off pad lanes.
        return out2d.reshape(1, n_lanes)[:, :n]

    # ---- two-pass fallback (large N) -----------------------------------------
    scores = pl.pallas_call(
        _scores_kernel,
        out_shape=jax.ShapeDtypeStruct((1, n_lanes), jnp.float32),
        grid=(num_tiles,),
        in_specs=[x_spec, w1_spec, b1_spec, w2_spec],
        out_specs=pl.BlockSpec((1, tile_n), lambda i: (0, i)),         # lane-dense tiles
        compiler_params=pltpu.CompilerParams(
            dimension_semantics=("parallel",),
            vmem_limit_bytes=vmem_limit,
        ),
    )(x, w1, b1, w2row)

    # TODO(synk): chunk this softmax (online max/sum) if n_lanes*4 ever approaches the
    # scoped-VMEM limit (N in the several-million range, hit earlier on v7x's 64 MiB).
    out = pl.pallas_call(
        functools.partial(_softmax_kernel, n_valid=n),
        out_shape=jax.ShapeDtypeStruct((1, n_lanes), jnp.float32),
        in_specs=[pl.BlockSpec((1, n_lanes), lambda: (0, 0))],
        out_specs=pl.BlockSpec((1, n_lanes), lambda: (0, 0)),
        compiler_params=pltpu.CompilerParams(vmem_limit_bytes=vmem_limit),
    )(scores)
    return out[:, :n]


def reference_forward(x, w1, b1, w2, b2):
    h = jnp.maximum(x @ w1 + b1, 0.0)
    s = h @ w2 + b2                     # (N, 1)
    return jax.nn.softmax(s.T, axis=1)  # (1, N)


if __name__ == "__main__":
    dim = 32
    hidden = 100
    n = 8

    key = jax.random.PRNGKey(0)
    kx, k1, k2, k3, k4 = jax.random.split(key, 5)

    # Deterministic parameter init (PyTorch-Linear-style uniform bounds).
    bound1 = 1.0 / (dim ** 0.5)
    bound2 = 1.0 / (hidden ** 0.5)
    x = jax.random.normal(kx, (n, dim), dtype=jnp.float32)
    w1 = jax.random.uniform(k1, (dim, hidden), jnp.float32, -bound1, bound1)
    b1 = jax.random.uniform(k2, (1, hidden), jnp.float32, -bound1, bound1)
    w2 = jax.random.uniform(k3, (hidden, 1), jnp.float32, -bound2, bound2)
    b2 = jax.random.uniform(k4, (1, 1), jnp.float32, -bound2, bound2)

    out = attention_forward(x, w1, b1, w2, b2)          # default: fused single launch
    jax.block_until_ready(out)

    ref = reference_forward(x, w1, b1, w2, b2)
    assert out.shape == (1, n), out.shape
    assert jnp.allclose(out, ref, atol=1e-5, rtol=1e-5), (out, ref)
    assert jnp.allclose(jnp.sum(out), 1.0, atol=1e-5)

    # Exercise the multi-tile / ragged-last-block fused path and the two-pass fallback.
    n2 = 1000
    x2 = jax.random.normal(jax.random.PRNGKey(1), (n2, dim), dtype=jnp.float32)
    ref2 = reference_forward(x2, w1, b1, w2, b2)
    out_fused = attention_forward(x2, w1, b1, w2, b2, tile_n=256, fuse_softmax=True)
    out_2pass = attention_forward(x2, w1, b1, w2, b2, tile_n=256, fuse_softmax=False)
    jax.block_until_ready((out_fused, out_2pass))
    assert out_fused.shape == (1, n2) and out_2pass.shape == (1, n2)
    assert jnp.allclose(out_fused, ref2, atol=1e-5, rtol=1e-4), "fused path mismatch"
    assert jnp.allclose(out_2pass, ref2, atol=1e-5, rtol=1e-4), "two-pass path mismatch"

    print("KERNEL_OK")
</pallas_src>

<mosaic_0001>
module attributes {stable_mosaic.version = 11 : i64} {
  func.func @_fused_kernel(%arg0: i32, %arg1: memref<128x32xf32, #tpu.memory_space<vmem>>, %arg2: memref<32x128xf32, #tpu.memory_space<vmem>>, %arg3: memref<1x128xf32, #tpu.memory_space<vmem>>, %arg4: memref<1x128xf32, #tpu.memory_space<vmem>>, %arg5: memref<1x128xf32, #tpu.memory_space<vmem>>) attributes {dimension_semantics = [#tpu.dimension_semantics<arbitrary>], iteration_bounds = array<i64: 1>, scalar_prefetch = 0 : i64, scratch_operands = 0 : i64, tpu.core_type = #tpu.core_type<tc>, window_params = [{transform_indices = @transform_0, window_bounds = array<i64: 128, 32>}, {pipeline_mode = #tpu.pipeline_mode<synchronous>, transform_indices = @transform_1, window_bounds = array<i64: 32, 128>}, {pipeline_mode = #tpu.pipeline_mode<synchronous>, transform_indices = @transform_2, window_bounds = array<i64: 1, 128>}, {pipeline_mode = #tpu.pipeline_mode<synchronous>, transform_indices = @transform_3, window_bounds = array<i64: 1, 128>}, {pipeline_mode = #tpu.pipeline_mode<synchronous>, transform_indices = @transform_4, window_bounds = array<i64: 1, 128>}]} {
    %c0 = arith.constant 0 : index
    %c0_0 = arith.constant 0 : index
    %0 = vector.load %arg1[%c0, %c0_0] : memref<128x32xf32, #tpu.memory_space<vmem>>, vector<128x32xf32>
    %c0_1 = arith.constant 0 : index
    %c0_2 = arith.constant 0 : index
    %1 = vector.load %arg2[%c0_1, %c0_2] : memref<32x128xf32, #tpu.memory_space<vmem>>, vector<32x128xf32>
    %cst = arith.constant dense<0.000000e+00> : vector<128x128xf32>
    %2 = tpu.matmul %0, %1, %cst {dimension_numbers = #tpu.dot_dimension_numbers<[1], [0], [0], [1], [0, 0, 1, 1], [], []>} : vector<128x32xf32>, vector<32x128xf32>, vector<128x128xf32> -> vector<128x128xf32>
    %c0_3 = arith.constant 0 : index
    %c0_4 = arith.constant 0 : index
    %3 = vector.load %arg3[%c0_3, %c0_4] : memref<1x128xf32, #tpu.memory_space<vmem>>, vector<1x128xf32>
    %4 = vector.broadcast %3 : vector<1x128xf32> to vector<128x128xf32>
    %5 = arith.addf %2, %4 : vector<128x128xf32>
    %cst_5 = arith.constant 0.000000e+00 : f32
    %6 = vector.broadcast %cst_5 : f32 to vector<128x128xf32>
    %7 = arith.maximumf %5, %6 : vector<128x128xf32>
    %c0_6 = arith.constant 0 : index
    %c0_7 = arith.constant 0 : index
    %8 = vector.load %arg4[%c0_6, %c0_7] : memref<1x128xf32, #tpu.memory_space<vmem>>, vector<1x128xf32>
    %9 = vector.broadcast %8 : vector<1x128xf32> to vector<128x128xf32>
    %10 = arith.mulf %7, %9 : vector<128x128xf32>
    %cst_8 = arith.constant dense<0.000000e+00> : vector<128xf32>
    %11 = vector.multi_reduction <add>, %10, %cst_8 [1] : vector<128x128xf32> to vector<128xf32>
    %12 = vector.shape_cast %11 : vector<128xf32> to vector<128x1xf32>
    %13 = vector.shape_cast %12 : vector<128x1xf32> to vector<1x128xf32>
    %14 = arith.index_cast %arg0 : i32 to index
    %c0_9 = arith.constant 0 : index
    %15 = vector.load %arg5[%14, %c0_9] : memref<1x128xf32, #tpu.memory_space<vmem>>, vector<1x128xf32>
    tpu.vector_store %arg5[%14, %c0_9], %13 {strides = array<i32>} : memref<1x128xf32, #tpu.memory_space<vmem>>, vector<1x128xf32>,
    %c0_i32 = arith.constant 0 : i32
    %16 = arith.cmpi eq, %arg0, %c0_i32 : i32
    %17 = arith.extui %16 : i1 to i32
    %c0_i32_10 = arith.constant 0 : i32
    %18 = arith.cmpi ne, %17, %c0_i32_10 : i32
    scf.if %18 {
      %c0_11 = arith.constant 0 : index
      %c0_12 = arith.constant 0 : index
      %19 = vector.load %arg5[%c0_11, %c0_12] : memref<1x128xf32, #tpu.memory_space<vmem>>, vector<1x128xf32>
      %20 = tpu.iota {dimensions = array<i32: 0>} : vector<1x128xi32>
      %21 = tpu.iota {dimensions = array<i32: 1>} : vector<1x128xi32>
      %c128_i32 = arith.constant 128 : i32
      %22 = vector.broadcast %c128_i32 : i32 to vector<1x128xi32>
      %23 = arith.muli %20, %22 : vector<1x128xi32>
      %24 = arith.addi %23, %21 : vector<1x128xi32>
      %c8_i32 = arith.constant 8 : i32
      %25 = vector.broadcast %c8_i32 : i32 to vector<1x128xi32>
      %26 = arith.cmpi slt, %24, %25 : vector<1x128xi32>
      %cst_13 = arith.constant 0xFF800000 : f32
      %27 = vector.broadcast %cst_13 : f32 to vector<1x128xf32>
      %28 = arith.select %26, %19, %27 : vector<1x128xi1>, vector<1x128xf32>
      %cst_14 = arith.constant dense<0xFF800000> : vector<1xf32>
      %29 = vector.multi_reduction <maximumf>, %28, %cst_14 [1] : vector<1x128xf32> to vector<1xf32>
      %30 = vector.shape_cast %29 : vector<1xf32> to vector<1x1xf32>
      %cst_15 = arith.constant dense<0xFF800000> : vector<1xf32>
      %31 = vector.multi_reduction <maximumf>, %30, %cst_15 [0] : vector<1x1xf32> to vector<1xf32>
      %32 = vector.shape_cast %31 : vector<1xf32> to vector<1x1xf32>
      %33 = vector.broadcast %32 : vector<1x1xf32> to vector<1x128xf32>
      %34 = arith.subf %28, %33 : vector<1x128xf32>
      %35 = math.exp %34 : vector<1x128xf32>
      %cst_16 = arith.constant dense<0.000000e+00> : vector<1xf32>
      %36 = vector.multi_reduction <add>, %35, %cst_16 [1] : vector<1x128xf32> to vector<1xf32>
      %37 = vector.shape_cast %36 : vector<1xf32> to vector<1x1xf32>
      %cst_17 = arith.constant dense<0.000000e+00> : vector<1xf32>
      %38 = vector.multi_reduction <add>, %37, %cst_17 [0] : vector<1x1xf32> to vector<1xf32>
      %39 = vector.shape_cast %38 : vector<1xf32> to vector<1x1xf32>
      %40 = tpu.reciprocal %39 : vector<1x1xf32> -> vector<1x1xf32>
      %41 = vector.broadcast %40 : vector<1x1xf32> to vector<1x128xf32>
      %42 = arith.mulf %35, %41 : vector<1x128xf32>
      %c0_18 = arith.constant 0 : index
      %c0_19 = arith.constant 0 : index
      %43 = vector.load %arg5[%c0_18, %c0_19] : memref<1x128xf32, #tpu.memory_space<vmem>>, vector<1x128xf32>
      tpu.vector_store %arg5[%c0_18, %c0_19], %42 {strides = array<i32>} : memref<1x128xf32, #tpu.memory_space<vmem>>, vector<1x128xf32>,
    } else {
    }
    return
  }
  func.func @transform_0(%arg0: i32) -> (i32, i32) {
    %c0_i32 = arith.constant 0 : i32
    %c0_i32_0 = arith.constant 0 : i32
    return %arg0, %c0_i32 : i32, i32
  }
  func.func @transform_1(%arg0: i32) -> (i32, i32) {
    %c0_i32 = arith.constant 0 : i32
    %c0_i32_0 = arith.constant 0 : i32
    %c0_i32_1 = arith.constant 0 : i32
    return %c0_i32, %c0_i32_0 : i32, i32
  }
  func.func @transform_2(%arg0: i32) -> (i32, i32) {
    %c0_i32 = arith.constant 0 : i32
    %c0_i32_0 = arith.constant 0 : i32
    %c0_i32_1 = arith.constant 0 : i32
    return %c0_i32, %c0_i32_0 : i32, i32
  }
  func.func @transform_3(%arg0: i32) -> (i32, i32) {
    %c0_i32 = arith.constant 0 : i32
    %c0_i32_0 = arith.constant 0 : i32
    %c0_i32_1 = arith.constant 0 : i32
    return %c0_i32, %c0_i32_0 : i32, i32
  }
  func.func @transform_4(%arg0: i32) -> (i32, i32) {
    %c0_i32 = arith.constant 0 : i32
    %c0_i32_0 = arith.constant 0 : i32
    %c0_i32_1 = arith.constant 0 : i32
    return %c0_i32, %c0_i32_0 : i32, i32
  }
}

</mosaic_0001>

<llo_original>
// kernel: tpu_custom_call.1
$region0: #{tpu_custom_call.1}
  #allocation0 [shape = 'u32[]', space=smem, size = 0x4, offset = 0x4, fixed_abs, tag = 'smem constant byte address 0x4 - core index']
  #allocation1 [shape = 'u32[144,128]{1,0:T(1,128)}', space=vmem, size = 0x12000, scoped, tag = 'internal scratch']
  %s0 = inlined_call_operand.hbm [shape: f32[8,32], index: 0, kind: input, shape index: {}]
  %s1 = inlined_call_operand.hbm [shape: f32[32,128], index: 1, kind: input, shape index: {}]
  %s2 = inlined_call_operand.vmem [shape: f32[1,128], index: 2, kind: input, shape index: {}]
  %s3 = inlined_call_operand.vmem [shape: f32[1,128], index: 3, kind: input, shape index: {}]
  %s4 = inlined_call_operand.hbm [shape: f32[1,128], index: 4, kind: output, shape index: {}]
  %s5 = sld [smem:[#allocation0]]
  $region38: #{tpu_custom_call.1} parent=0
    _
  %s7 = ssub.s32 1, %s5
  %s8 = scalar_select 0, %s7, %s5
  $region1: #{tpu_custom_call.1} parent=0
    #allocation2 [shape = 'u8[65536]{0}', space=vmem, size = 0x10000, scoped, tag = 'input window, operand 0, single buffered']
    #allocation3 [shape = 's32[1]{0}', space=sflag, size = 0x4, scoped, tag = 'scoped memory for tpu_custom_call.1']
    #allocation4 [shape = 's32[1]{0}', space=sflag, size = 0x4, scoped, tag = 'scoped memory for tpu_custom_call.1']
    #allocation5 [shape = 'u8[16384]{0}', space=vmem, size = 0x4000, scoped, tag = 'input window, operand 1, single buffered']
    #allocation6 [shape = 's32[1]{0}', space=sflag, size = 0x4, scoped, tag = 'scoped memory for tpu_custom_call.1']
    #allocation7 [shape = 'u8[512]{0}', space=vmem, size = 0x400, scoped, tag = 'output window, operand 0, single buffered']
    %9 = vsyncpa [#allocation3], 0
    %10 = vsyncpa [#allocation6], 0
    %11 = vsyncpa [#allocation4], 0
    // Predicated region
    $region2: #{tpu_custom_call.1} parent=1 // pred_check
      _
    $region3: #{tpu_custom_call.1} parent=1 // pred_check_branch
      %13 = sbr.rel (0) target = $region5
    $region4: #{tpu_custom_call.1} parent=1 // pred_region
      %s15 = ssub.s32 2048, 128
      %16 = vsyncadd [#allocation3], %s15
      %s17 = sshll.u32 [#allocation2], 4
      %s18 = int_to_ptr.vmem [resolvable:$true] %s17
      %23 = dma.hbm_to_vmem [thread:$0]  %s0, 128, %s18, [#allocation3], 128, 128, 8
    $region5: #{tpu_custom_call.1} parent=1 // pred_fallthru
      _
    // Predicated region
    $region6: #{tpu_custom_call.1} parent=1 // pred_check
      _
    $region7: #{tpu_custom_call.1} parent=1 // pred_check_branch
      %25 = sbr.rel (0) target = $region9
    $region8: #{tpu_custom_call.1} parent=1 // pred_region
      %s27 = ssub.s32 512, 512
      %28 = vsyncadd [#allocation6], %s27
      %s29 = sshll.u32 [#allocation5], 4
      %s30 = int_to_ptr.vmem [resolvable:$true] %s29
      %35 = dma.hbm_to_vmem [thread:$0]  %s1, 512, %s30, [#allocation6], 128, 128, 8
    $region9: #{tpu_custom_call.1} parent=1 // pred_fallthru
      _
    // Predicated region
    $region10: #{tpu_custom_call.1} parent=1 // pred_check
      _
    $region11: #{tpu_custom_call.1} parent=1 // pred_check_branch
      %37 = sbr.rel (0) target = $region13
    $region12: #{tpu_custom_call.1} parent=1 // pred_region
      _
    $region13: #{tpu_custom_call.1} parent=1 // pred_fallthru
      _
    // Predicated region
    $region14: #{tpu_custom_call.1} parent=1 // pred_check
      _
    $region15: #{tpu_custom_call.1} parent=1 // pred_check_branch
      %39 = sbr.rel (0) target = $region17
    $region16: #{tpu_custom_call.1} parent=1 // pred_region
      _
    $region17: #{tpu_custom_call.1} parent=1 // pred_fallthru
      _
    // Predicated region
    $region18: #{tpu_custom_call.1} parent=1 // pred_check
      _
    $region19: #{tpu_custom_call.1} parent=1 // pred_check_branch
      %41 = sbr.rel (0) target = $region21
    $region20: #{tpu_custom_call.1} parent=1 // pred_region
      %42 = dma.done [#allocation3], 2048
    $region21: #{tpu_custom_call.1} parent=1 // pred_fallthru
      _
    // Predicated region
    $region22: #{tpu_custom_call.1} parent=1 // pred_check
      _
    $region23: #{tpu_custom_call.1} parent=1 // pred_check_branch
      %44 = sbr.rel (0) target = $region25
    $region24: #{tpu_custom_call.1} parent=1 // pred_region
      %45 = dma.done [#allocation6], 512
    $region25: #{tpu_custom_call.1} parent=1 // pred_fallthru
      _
    %v46 = vld [vmem:[#allocation2] sm:$0xff]
    %v47 = vld [vmem:[#allocation2 + $0x8] sm:$0xff]
    %v48 = vld [vmem:[#allocation2 + $0x10] sm:$0xff]
    %v49 = vld [vmem:[#allocation2 + $0x18] sm:$0xff]
    %v50 = vld [vmem:[#allocation2 + $0x20] sm:$0xff]
    %v51 = vld [vmem:[#allocation2 + $0x28] sm:$0xff]
    %v52 = vld [vmem:[#allocation2 + $0x30] sm:$0xff]
    %v53 = vld [vmem:[#allocation2 + $0x38] sm:$0xff]
    %v54 = vld [vmem:[#allocation2 + $0x40] sm:$0xff]
    %v55 = vld [vmem:[#allocation2 + $0x48] sm:$0xff]
    %v56 = vld [vmem:[#allocation2 + $0x50] sm:$0xff]
    %v57 = vld [vmem:[#allocation2 + $0x58] sm:$0xff]
    %v58 = vld [vmem:[#allocation2 + $0x60] sm:$0xff]
    %v59 = vld [vmem:[#allocation2 + $0x68] sm:$0xff]
    %v60 = vld [vmem:[#allocation2 + $0x70] sm:$0xff]
    %v61 = vld [vmem:[#allocation2 + $0x78] sm:$0xff]
    %v62 = vld [vmem:[#allocation5] sm:$0xff]
    %v63 = vld [vmem:[#allocation5 + $0x8] sm:$0xff]
    %v64 = vld [vmem:[#allocation5 + $0x10] sm:$0xff]
    %v65 = vld [vmem:[#allocation5 + $0x18] sm:$0xff]
    %v66 = vld [vmem:[%s2] sm:$0x1]
    %v68 = vlaneseq
    %v69 = vshrl.u32 %v68, 7
    %v70 = vsub.s32 0, %v69
    %v71 = vrot.slane %v66, %v70
    %vm73 = vcmask 261120
    %v75 = vsel %vm73, %v46, 0
    %v78 = vsel %vm73, %v47, 0
    %v81 = vsel %vm73, %v48, 0
    %v84 = vsel %vm73, %v49, 0
    %v87 = vsel %vm73, %v50, 0
    %v90 = vsel %vm73, %v51, 0
    %v93 = vsel %vm73, %v52, 0
    %v96 = vsel %vm73, %v53, 0
    %v99 = vsel %vm73, %v54, 0
    %v102 = vsel %vm73, %v55, 0
    %v105 = vsel %vm73, %v56, 0
    %v108 = vsel %vm73, %v57, 0
    %v111 = vsel %vm73, %v58, 0
    %v114 = vsel %vm73, %v59, 0
    %v117 = vsel %vm73, %v60, 0
    %v120 = vsel %vm73, %v61, 0
    %122 = vmatprep.subr.mxu0 0.0
    %123 = vmatpush1.msra.mxu0 0.0
    %124 = vmatprep.subr.mxu0 0.0
    %125 = vmatpush1.msra.mxu0 0.0
    %126 = vmatprep.subr.mxu0 0.0
    %127 = vmatpush1.msra.mxu0 0.0
    %128 = vmatprep.subr.mxu0 0.0
    %129 = vmatpush1.msra.mxu0 0.0
    %130 = vmatprep.subr.mxu0 0.0
    %131 = vmatpush1.msra.mxu0 0.0
    %132 = vmatprep.subr.mxu0 0.0
    %133 = vmatpush1.msra.mxu0 0.0
    %134 = vmatprep.subr.mxu0 0.0
    %135 = vmatpush1.msra.mxu0 0.0
    %136 = vmatprep.subr.mxu0 0.0
    %137 = vmatpush1.msra.mxu0 0.0
    %138 = vmatprep.subr.mxu0 0.0
    %139 = vmatpush1.msra.mxu0 0.0
    %140 = vmatprep.subr.mxu0 0.0
    %141 = vmatpush1.msra.mxu0 0.0
    %142 = vmatprep.subr.mxu0 0.0
    %143 = vmatpush1.msra.mxu0 0.0
    %144 = vmatprep.subr.mxu0 0.0
    %145 = vmatpush1.msra.mxu0 0.0
    %146 = vmatprep.subr.mxu0 0.0
    %147 = vmatpush1.msra.mxu0 %v65
    %148 = vmatprep.subr.mxu0 0.0
    %149 = vmatpush1.msra.mxu0 %v64
    %150 = vmatprep.subr.mxu0 0.0
    %151 = vmatpush1.msra.mxu0 %v63
    %152 = vmatprep.subr.mxu0 0.0
    %153 = vmatpush1.msra.mxu0 %v62
    %154 = vmatprep.subr.mxu0 0.0
    %155 = vmatpush2.msra.mxu0 0.0
    %156 = vmatprep.subr.mxu0 0.0
    %157 = vmatpush2.msra.mxu0 0.0
    %158 = vmatprep.subr.mxu0 0.0
    %159 = vmatpush2.msra.mxu0 0.0
    %160 = vmatprep.subr.mxu0 0.0
    %161 = vmatpush2.msra.mxu0 0.0
    %162 = vmatprep.subr.mxu0 0.0
    %163 = vmatpush2.msra.mxu0 0.0
    %164 = vmatprep.subr.mxu0 0.0
    %165 = vmatpush2.msra.mxu0 0.0
    %166 = vmatprep.subr.mxu0 0.0
    %167 = vmatpush2.msra.mxu0 0.0
    %168 = vmatprep.subr.mxu0 0.0
    %169 = vmatpush2.msra.mxu0 0.0
    %170 = vmatprep.subr.mxu0 0.0
    %171 = vmatpush2.msra.mxu0 0.0
    %172 = vmatprep.subr.mxu0 0.0
    %173 = vmatpush2.msra.mxu0 0.0
    %174 = vmatprep.subr.mxu0 0.0
    %175 = vmatpush2.msra.mxu0 0.0
    %176 = vmatprep.subr.mxu0 0.0
    %177 = vmatpush2.msra.mxu0 0.0
    %178 = vmatprep.subr.mxu0 0.0
    %179 = vmatpush2.msra.mxu0 0.0
    %180 = vmatprep.subr.mxu0 0.0
    %181 = vmatpush2.msra.mxu0 0.0
    %182 = vmatprep.subr.mxu0 0.0
    %183 = vmatpush2.msra.mxu0 0.0
    %184 = vmatprep.subr.mxu0 0.0
    %185 = vmatpush2.msra.mxu0 0.0
    %186 = vmatprep.mubr.f32.mxu0 0.0
    %187 = vmatmul.mubr.f32.gmra.mxu0 %v75
    %v188 = vpop.f32.mrf.mxu0
    %v189 = vadd.f32 %v71, %v188
    %v190 = vpop.f32.mrf.mxu0
    %191 = vmatprep.mubr.f32.mxu0 0.0
    %192 = vmatmul.mubr.f32.gmra.mxu0 %v78
    %v193 = vpop.f32.mrf.mxu0
    %v194 = vadd.f32 %v71, %v193
    %v195 = vpop.f32.mrf.mxu0
    %196 = vmatprep.mubr.f32.mxu0 0.0
    %197 = vmatmul.mubr.f32.gmra.mxu0 %v81
    %v198 = vpop.f32.mrf.mxu0
    %v199 = vadd.f32 %v71, %v198
    %v200 = vpop.f32.mrf.mxu0
    %201 = vmatprep.mubr.f32.mxu0 0.0
    %202 = vmatmul.mubr.f32.gmra.mxu0 %v84
    %v203 = vpop.f32.mrf.mxu0
    %v204 = vadd.f32 %v71, %v203
    %v205 = vpop.f32.mrf.mxu0
    %206 = vmatprep.mubr.f32.mxu0 0.0
    %207 = vmatmul.mubr.f32.gmra.mxu0 %v87
    %v208 = vpop.f32.mrf.mxu0
    %v209 = vadd.f32 %v71, %v208
    %v210 = vpop.f32.mrf.mxu0
    %211 = vmatprep.mubr.f32.mxu0 0.0
    %212 = vmatmul.mubr.f32.gmra.mxu0 %v90
    %v213 = vpop.f32.mrf.mxu0
    %v214 = vadd.f32 %v71, %v213
    %v215 = vpop.f32.mrf.mxu0
    %216 = vmatprep.mubr.f32.mxu0 0.0
    %217 = vmatmul.mubr.f32.gmra.mxu0 %v93
    %v218 = vpop.f32.mrf.mxu0
    %v219 = vadd.f32 %v71, %v218
    %v220 = vpop.f32.mrf.mxu0
    %221 = vmatprep.mubr.f32.mxu0 0.0
    %222 = vmatmul.mubr.f32.gmra.mxu0 %v96
    %v223 = vpop.f32.mrf.mxu0
    %v224 = vadd.f32 %v71, %v223
    %v225 = vpop.f32.mrf.mxu0
    %226 = vmatprep.mubr.f32.mxu0 0.0
    %227 = vmatmul.mubr.f32.gmra.mxu0 %v99
    %v228 = vpop.f32.mrf.mxu0
    %v229 = vadd.f32 %v71, %v228
    %v230 = vpop.f32.mrf.mxu0
    %231 = vmatprep.mubr.f32.mxu0 0.0
    %232 = vmatmul.mubr.f32.gmra.mxu0 %v102
    %v233 = vpop.f32.mrf.mxu0
    %v234 = vadd.f32 %v71, %v233
    %v235 = vpop.f32.mrf.mxu0
    %236 = vmatprep.mubr.f32.mxu0 0.0
    %237 = vmatmul.mubr.f32.gmra.mxu0 %v105
    %v238 = vpop.f32.mrf.mxu0
    %v239 = vadd.f32 %v71, %v238
    %v240 = vpop.f32.mrf.mxu0
    %241 = vmatprep.mubr.f32.mxu0 0.0
    %242 = vmatmul.mubr.f32.gmra.mxu0 %v108
    %v243 = vpop.f32.mrf.mxu0
    %v244 = vadd.f32 %v71, %v243
    %v245 = vpop.f32.mrf.mxu0
    %246 = vmatprep.mubr.f32.mxu0 0.0
    %247 = vmatmul.mubr.f32.gmra.mxu0 %v111
    %v248 = vpop.f32.mrf.mxu0
    %v249 = vadd.f32 %v71, %v248
    %v250 = vpop.f32.mrf.mxu0
    %251 = vmatprep.mubr.f32.mxu0 0.0
    %252 = vmatmul.mubr.f32.gmra.mxu0 %v114
    %v253 = vpop.f32.mrf.mxu0
    %v254 = vadd.f32 %v71, %v253
    %v255 = vpop.f32.mrf.mxu0
    %256 = vmatprep.mubr.f32.mxu0 0.0
    %257 = vmatmul.mubr.f32.gmra.mxu0 %v117
    %v258 = vpop.f32.mrf.mxu0
    %v259 = vadd.f32 %v71, %v258
    %v260 = vpop.f32.mrf.mxu0
    %261 = vmatprep.mubr.f32.mxu0 0.0
    %262 = vmatmul.mubr.f32.gmra.mxu0 %v120
    %v263 = vpop.f32.mrf.mxu0
    %v264 = vadd.f32 %v71, %v263
    %v265 = vpop.f32.mrf.mxu0
    %266 = vdwg.mxu0
    %v267 = vmax.f32 %v189, 0.0
    %v268 = vmax.f32 %v194, 0.0
    %v269 = vmax.f32 %v199, 0.0
    %v270 = vmax.f32 %v204, 0.0
    %v271 = vmax.f32 %v209, 0.0
    %v272 = vmax.f32 %v214, 0.0
    %v273 = vmax.f32 %v219, 0.0
    %v274 = vmax.f32 %v224, 0.0
    %v275 = vmax.f32 %v229, 0.0
    %v276 = vmax.f32 %v234, 0.0
    %v277 = vmax.f32 %v239, 0.0
    %v278 = vmax.f32 %v244, 0.0
    %v279 = vmax.f32 %v249, 0.0
    %v280 = vmax.f32 %v254, 0.0
    %v281 = vmax.f32 %v259, 0.0
    %v282 = vmax.f32 %v264, 0.0
    %v283 = vld [vmem:[%s3] sm:$0x1]
    %v285 = vlaneseq
    %v286 = vshrl.u32 %v285, 7
    %v287 = vsub.s32 0, %v286
    %v288 = vrot.slane %v283, %v287
    %v290 = vmul.f32 %v267, %v288
    %v291 = vmul.f32 %v268, %v288
    %v292 = vmul.f32 %v269, %v288
    %v293 = vmul.f32 %v270, %v288
    %v294 = vmul.f32 %v271, %v288
    %v295 = vmul.f32 %v272, %v288
    %v296 = vmul.f32 %v273, %v288
    %v297 = vmul.f32 %v274, %v288
    %v298 = vmul.f32 %v275, %v288
    %v299 = vmul.f32 %v276, %v288
    %v300 = vmul.f32 %v277, %v288
    %v301 = vmul.f32 %v278, %v288
    %v302 = vmul.f32 %v279, %v288
    %v303 = vmul.f32 %v280, %v288
    %v304 = vmul.f32 %v281, %v288
    %v305 = vmul.f32 %v282, %v288
    %306 = vadd.xlane.f32.xlu0 %v290
    %v307 = vpop.xlane.xlu0 %306
    %308 = vadd.xlane.f32.xlu0 %v291
    %v309 = vpop.xlane.xlu0 %308
    %310 = vadd.xlane.f32.xlu0 %v292
    %v311 = vpop.xlane.xlu0 %310
    %312 = vadd.xlane.f32.xlu0 %v293
    %v313 = vpop.xlane.xlu0 %312
    %314 = vadd.xlane.f32.xlu0 %v294
    %v315 = vpop.xlane.xlu0 %314
    %316 = vadd.xlane.f32.xlu0 %v295
    %v317 = vpop.xlane.xlu0 %316
    %318 = vadd.xlane.f32.xlu0 %v296
    %v319 = vpop.xlane.xlu0 %318
    %320 = vadd.xlane.f32.xlu0 %v297
    %v321 = vpop.xlane.xlu0 %320
    %322 = vadd.xlane.f32.xlu0 %v298
    %v323 = vpop.xlane.xlu0 %322
    %324 = vadd.xlane.f32.xlu0 %v299
    %v325 = vpop.xlane.xlu0 %324
    %326 = vadd.xlane.f32.xlu0 %v300
    %v327 = vpop.xlane.xlu0 %326
    %328 = vadd.xlane.f32.xlu0 %v301
    %v329 = vpop.xlane.xlu0 %328
    %330 = vadd.xlane.f32.xlu0 %v302
    %v331 = vpop.xlane.xlu0 %330
    %332 = vadd.xlane.f32.xlu0 %v303
    %v333 = vpop.xlane.xlu0 %332
    %334 = vadd.xlane.f32.xlu0 %v304
    %v335 = vpop.xlane.xlu0 %334
    %336 = vadd.xlane.f32.xlu0 %v305
    %v337 = vpop.xlane.xlu0 %336
    %v354 = vlaneseq
    %v355 = vand.u32 %v354, 127
    %v356 = vlaneseq
    %v357 = vshrl.u32 %v356, 7
    %v358 = vsub.s32 %v355, %v357
    %v359 = vrot.slane %v307, %v358
    %v360 = vadd.s32 %v355, 4294967288
    %v361 = vlaneseq
    %v362 = vshrl.u32 %v361, 7
    %v363 = vsub.s32 %v360, %v362
    %v364 = vrot.slane %v309, %v363
    %vm365 = vcmask 130112
    %v366 = vsel %vm365, %v364, %v359
    %v367 = vadd.s32 %v355, 4294967280
    %v368 = vlaneseq
    %v369 = vshrl.u32 %v368, 7
    %v370 = vsub.s32 %v367, %v369
    %v371 = vrot.slane %v311, %v370
    %vm372 = vcmask 195712
    %v373 = vsel %vm372, %v371, %v366
    %v374 = vadd.s32 %v355, 4294967272
    %v375 = vlaneseq
    %v376 = vshrl.u32 %v375, 7
    %v377 = vsub.s32 %v374, %v376
    %v378 = vrot.slane %v313, %v377
    %vm379 = vcmask 261312
    %v380 = vsel %vm379, %v378, %v373
    %v381 = vadd.s32 %v355, 4294967264
    %v382 = vlaneseq
    %v383 = vshrl.u32 %v382, 7
    %v384 = vsub.s32 %v381, %v383
    %v385 = vrot.slane %v315, %v384
    %vm386 = vcmask 326912
    %v387 = vsel %vm386, %v385, %v380
    %v388 = vadd.s32 %v355, 4294967256
    %v389 = vlaneseq
    %v390 = vshrl.u32 %v389, 7
    %v391 = vsub.s32 %v388, %v390
    %v392 = vrot.slane %v317, %v391
    %vm393 = vcmask 392512
    %v394 = vsel %vm393, %v392, %v387
    %v395 = vadd.s32 %v355, 4294967248
    %v396 = vlaneseq
    %v397 = vshrl.u32 %v396, 7
    %v398 = vsub.s32 %v395, %v397
    %v399 = vrot.slane %v319, %v398
    %vm400 = vcmask 458112
    %v401 = vsel %vm400, %v399, %v394
    %v402 = vadd.s32 %v355, 4294967240
    %v403 = vlaneseq
    %v404 = vshrl.u32 %v403, 7
    %v405 = vsub.s32 %v402, %v404
    %v406 = vrot.slane %v321, %v405
    %vm407 = vcmask 523712
    %v408 = vsel %vm407, %v406, %v401
    %v409 = vadd.s32 %v355, 4294967232
    %v410 = vlaneseq
    %v411 = vshrl.u32 %v410, 7
    %v412 = vsub.s32 %v409, %v411
    %v413 = vrot.slane %v323, %v412
    %vm414 = vcmask 589312
    %v415 = vsel %vm414, %v413, %v408
    %v416 = vadd.s32 %v355, 4294967224
    %v417 = vlaneseq
    %v418 = vshrl.u32 %v417, 7
    %v419 = vsub.s32 %v416, %v418
    %v420 = vrot.slane %v325, %v419
    %vm421 = vcmask 654912
    %v422 = vsel %vm421, %v420, %v415
    %v423 = vadd.s32 %v355, 4294967216
    %v424 = vlaneseq
    %v425 = vshrl.u32 %v424, 7
    %v426 = vsub.s32 %v423, %v425
    %v427 = vrot.slane %v327, %v426
    %vm428 = vcmask 720512
    %v429 = vsel %vm428, %v427, %v422
    %v430 = vadd.s32 %v355, 4294967208
    %v431 = vlaneseq
    %v432 = vshrl.u32 %v431, 7
    %v433 = vsub.s32 %v430, %v432
    %v434 = vrot.slane %v329, %v433
    %vm435 = vcmask 786112
    %v436 = vsel %vm435, %v434, %v429
    %v437 = vadd.s32 %v355, 4294967200
    %v438 = vlaneseq
    %v439 = vshrl.u32 %v438, 7
    %v440 = vsub.s32 %v437, %v439
    %v441 = vrot.slane %v331, %v440
    %vm442 = vcmask 851712
    %v443 = vsel %vm442, %v441, %v436
    %v444 = vadd.s32 %v355, 4294967192
    %v445 = vlaneseq
    %v446 = vshrl.u32 %v445, 7
    %v447 = vsub.s32 %v444, %v446
    %v448 = vrot.slane %v333, %v447
    %vm449 = vcmask 917312
    %v450 = vsel %vm449, %v448, %v443
    %v451 = vadd.s32 %v355, 4294967184
    %v452 = vlaneseq
    %v453 = vshrl.u32 %v452, 7
    %v454 = vsub.s32 %v451, %v453
    %v455 = vrot.slane %v335, %v454
    %vm456 = vcmask 982912
    %v457 = vsel %vm456, %v455, %v450
    %v458 = vadd.s32 %v355, 4294967176
    %v459 = vlaneseq
    %v460 = vshrl.u32 %v459, 7
    %v461 = vsub.s32 %v458, %v460
    %v462 = vrot.slane %v337, %v461
    %vm463 = vcmask 1048512
    %v464 = vsel %vm463, %v462, %v457
    %466 = vst [vmem:[#allocation7] sm:$0x1] %v464
    %p467 = scmp.eq.s32.totalorder 0, 0
    // Predicated region
    $region26: #{tpu_custom_call.1} parent=1 // pred_check
      %p468 = pneg %p467
    $region27: #{tpu_custom_call.1} parent=1 // pred_check_branch
      %470 = sbr.rel (%p468) target = $region29
    $region28: #{tpu_custom_call.1} parent=1 // pred_region
      %v471 = vld [vmem:[#allocation7] sm:$0x1]
      %v472 = vlaneseq
      %v473 = vshrl.u32 %v472, 7
      %v474 = vmul.u32 %v473, 128
      %v475 = vadd.s32 %v474, %v355
      %vm476 = vcmp.lt.s32.totalorder %v475, 8
      %v477 = vsel %vm476, %v471, -inf
      %vm478 = vcmask 1040384
      %v479 = vsel %vm478, %v477, -inf
      %480 = vmax.xlane.f32.xlu0 %v479
      %v481 = vpop.xlane.xlu0 %480
      %v482 = vsub.f32 %v477, %v481
      %v483 = vmul.f32 %v482, 1.442695
      %v484 = vpow.pop %v483
      %v485 = vsel %vm478, %v484, 0.0
      %486 = vadd.xlane.f32.xlu0 %v485
      %v487 = vpop.xlane.xlu0 %486
      %v488 = vadd.f32 %v487, 0.0
      %v489 = vrcp.pop %v488
      %v490 = vmul.f32 %v484, %v489
      %491 = vst [vmem:[#allocation7] sm:$0x1] %v490
    $region29: #{tpu_custom_call.1} parent=1 // pred_fallthru
      _
    // Predicated region
    $region30: #{tpu_custom_call.1} parent=1 // pred_check
      _
    $region31: #{tpu_custom_call.1} parent=1 // pred_check_branch
      %493 = sbr.rel (0) target = $region33
    $region32: #{tpu_custom_call.1} parent=1 // pred_region
      %s495 = ssub.s32 16, 16
      %496 = vsyncadd [#allocation4], %s495
      %s498 = sshll.u32 [#allocation7], 4
      %s499 = int_to_ptr.vmem [resolvable:$true] %s498
      %501 = dma.vmem_to_hbm [thread:$0]  %s499, 16, %s4, [#allocation4]
    $region33: #{tpu_custom_call.1} parent=1 // pred_fallthru
      _
    // Predicated region
    $region34: #{tpu_custom_call.1} parent=1 // pred_check
      _
    $region35: #{tpu_custom_call.1} parent=1 // pred_check_branch
      %503 = sbr.rel (0) target = $region37
    $region36: #{tpu_custom_call.1} parent=1 // pred_region
      %504 = dma.done [#allocation4], 16
    $region37: #{tpu_custom_call.1} parent=1 // pred_fallthru
      _
    %505 = vsyncpa [#allocation3], 1
    %506 = vsyncpa [#allocation6], 1
    %507 = vsyncpa [#allocation4], 1

</llo_original>
